<compile_context>
chip_gen: v7x
topology: tpu7x:2x2x1
jax: 0.10.0
libtpu: 0.0.40
codegen_flags: <defaults>
</compile_context>

<pallas_src>
import functools

import jax
import jax.numpy as jnp
from jax import lax
from jax.experimental import pallas as pl
from jax.experimental.pallas import tpu as pltpu


def _round_up(x: int, m: int) -> int:
    return (x + m - 1) // m * m


def _router_kernel(x_ref, w_ref, b_ref, z_ref, probs_ref, idx_ref, *,
                   num_experts: int, top_k: int, e_pad: int):
    t = x_ref.shape[0]

    # Single fused matmul on the MXU: (T, D) bf16 @ (D, 2*E_pad) bf16 -> f32.
    fused = jnp.dot(x_ref[...], w_ref[...],
                    preferred_element_type=jnp.float32) + b_ref[...]
    logits = fused[:, :e_pad]          # (T, E_pad)  lanes [0, e_pad)
    noise_logits = fused[:, e_pad:]    # (T, E_pad)  vreg-aligned slice

    # softplus(noise_logits), numerically stable; exp/log ride the EUP slot.
    sp = jnp.maximum(noise_logits, 0.0) + jnp.log1p(
        jnp.exp(-jnp.abs(noise_logits)))
    noisy = logits + z_ref[...] * sp

    lane = lax.broadcasted_iota(jnp.int32, (t, e_pad), 1)
    lane_f = lane.astype(jnp.float32)
    neg_inf = jnp.float32(-jnp.inf)
    # Mask the padded (non-existent) experts out of the top-k / softmax.
    noisy = jnp.where(lane < num_experts, noisy, neg_inf)

    # Iterative top-k: k rounds of (max -> lowest index of max -> mask out).
    work = noisy
    keep = jnp.zeros((t, e_pad), dtype=jnp.bool_)
    idx_f = jnp.zeros((t, e_pad), dtype=jnp.float32)   # column k = k-th index
    for k in range(top_k):
        m = jnp.max(work, axis=-1, keepdims=True)
        is_max = work == m
        sel = jnp.min(jnp.where(is_max, lane_f, jnp.float32(e_pad)),
                      axis=-1, keepdims=True)
        onehot = lane_f == sel
        keep = jnp.logical_or(keep, onehot)
        work = jnp.where(onehot, neg_inf, work)
        idx_f = jnp.where(lane == k, sel, idx_f)

    # scatter(-inf elsewhere) + softmax over experts.
    sparse = jnp.where(keep, noisy, neg_inf)
    rowmax = jnp.max(sparse, axis=-1, keepdims=True)
    ex = jnp.exp(sparse - rowmax)
    probs = ex / jnp.sum(ex, axis=-1, keepdims=True)   # (T, E_pad)

    # Lane-dense stores: full-tile 32-bit XLU transpose, store expert-major so
    # the output minor dim is the 128-multiple token tile -> unmasked stores.
    probs_ref[...] = jnp.transpose(probs)[:num_experts, :]
    idx_ref[...] = jnp.transpose(idx_f)[:top_k, :].astype(jnp.int32)


def noisy_topk_router(x, w_route, b_route, w_noise, b_noise, noise_key, *,
                      top_k: int, token_tile: int = 512):
    """x: (..., D). Returns (router_output (..., E) f32, indices (..., K) i32)."""
    d = x.shape[-1]
    e = w_route.shape[0]
    assert 0 < top_k <= e
    lead = x.shape[:-1]
    xt = x.reshape(-1, d)
    n = xt.shape[0]

    e_pad = _round_up(e, 128)
    # Token tile: a multiple of 128 (lane-dense outputs), as large as the
    # token count allows, capped by `token_tile` (512 fits v7x's 64 MiB VMEM).
    tile = max(128, min(_round_up(token_tile, 128), _round_up(n, 128)))
    n_pad = _round_up(n, tile)

    # bf16 activation stream; padded rows are zeros and sliced off afterwards.
    xp = jnp.pad(xt.astype(jnp.bfloat16), ((0, n_pad - n), (0, 0)))

    # Fused router+noise projection; each E-block padded to a 128-lane
    # boundary so the in-kernel split is a whole-vreg slice.
    wcat = jnp.zeros((d, 2 * e_pad), jnp.float32)
    wcat = wcat.at[:, :e].set(jnp.transpose(w_route).astype(jnp.float32))
    wcat = wcat.at[:, e_pad:e_pad + e].set(
        jnp.transpose(w_noise).astype(jnp.float32))
    wcat = wcat.astype(jnp.bfloat16)
    bcat = jnp.zeros((1, 2 * e_pad), jnp.float32)
    bcat = bcat.at[:, :e].set(b_route.reshape(1, e).astype(jnp.float32))
    bcat = bcat.at[:, e_pad:e_pad + e].set(
        b_noise.reshape(1, e).astype(jnp.float32))

    # Standard-normal noise (== torch.randn_like(logits)); generated outside
    # the kernel so lowering works on all backends, streamed in per token tile.
    z = jax.random.normal(noise_key, (n_pad, e_pad), dtype=jnp.float32)

    grid = (n_pad // tile,)
    kernel = functools.partial(_router_kernel, num_experts=e, top_k=top_k,
                               e_pad=e_pad)

    probs_t, idx_t = pl.pallas_call(
        kernel,
        grid=grid,
        in_specs=[
            pl.BlockSpec((tile, d), lambda i: (i, 0)),           # x tile
            # Grid-invariant weight/bias: constant index map -> fetched once.
            pl.BlockSpec((d, 2 * e_pad), lambda i: (0, 0)),      # W fused
            pl.BlockSpec((1, 2 * e_pad), lambda i: (0, 0)),      # b fused
            pl.BlockSpec((tile, e_pad), lambda i: (i, 0)),       # noise tile
        ],
        out_specs=(
            pl.BlockSpec((e, tile), lambda i: (0, i)),           # probs^T
            pl.BlockSpec((top_k, tile), lambda i: (0, i)),       # idx^T
        ),
        out_shape=(
            jax.ShapeDtypeStruct((e, n_pad), jnp.float32),
            jax.ShapeDtypeStruct((top_k, n_pad), jnp.int32),
        ),
        compiler_params=pltpu.CompilerParams(
            dimension_semantics=("parallel",)),
    )(xp, wcat, bcat, z)

    probs = jnp.transpose(probs_t[:, :n]).reshape(*lead, e)
    idx = jnp.transpose(idx_t[:, :n]).reshape(*lead, top_k)
    return probs, idx


if __name__ == "__main__":
    # Small config consistent with the module: dim=32, num_experts=8, top_k=2.
    batch, seq, dim, num_experts, top_k = 2, 8, 32, 8, 2

    key = jax.random.PRNGKey(0)
    kx, kwr, kbr, kwn, kbn, knoise = jax.random.split(key, 6)

    # Deterministic "nn.Linear" parameters (weight: (E, D), bias: (E,)).
    bound = 1.0 / jnp.sqrt(dim)
    w_route = jax.random.uniform(kwr, (num_experts, dim), minval=-bound, maxval=bound)
    b_route = jax.random.uniform(kbr, (num_experts,), minval=-bound, maxval=bound)
    w_noise = jax.random.uniform(kwn, (num_experts, dim), minval=-bound, maxval=bound)
    b_noise = jax.random.uniform(kbn, (num_experts,), minval=-bound, maxval=bound)

    x = jax.random.normal(kx, (batch, seq, dim), dtype=jnp.float32)

    router_output, indices = noisy_topk_router(
        x, w_route, b_route, w_noise, b_noise, knoise, top_k=top_k)
    jax.block_until_ready((router_output, indices))

    # Sanity: probabilities sum to 1, exactly top_k nonzero per row, and the
    # returned indices are valid, distinct and point at the nonzero probs.
    assert router_output.shape == (batch, seq, num_experts)
    assert indices.shape == (batch, seq, top_k)
    assert jnp.allclose(jnp.sum(router_output, axis=-1), 1.0, atol=1e-5)
    assert jnp.all(jnp.sum(router_output > 0, axis=-1) == top_k)
    assert jnp.all((indices >= 0) & (indices < num_experts))
    s_idx = jnp.sort(indices, axis=-1)
    assert jnp.all(s_idx[..., 1:] != s_idx[..., :-1])
    assert jnp.all(jnp.take_along_axis(router_output, indices, axis=-1) > 0)

    print("KERNEL_OK")
</pallas_src>

<mosaic_0001>
module attributes {stable_mosaic.version = 11 : i64} {
  func.func @_router_kernel(%arg0: i32, %arg1: memref<128x32xbf16, #tpu.memory_space<vmem>>, %arg2: memref<32x256xbf16, #tpu.memory_space<vmem>>, %arg3: memref<1x256xf32, #tpu.memory_space<vmem>>, %arg4: memref<128x128xf32, #tpu.memory_space<vmem>>, %arg5: memref<8x128xf32, #tpu.memory_space<vmem>>, %arg6: memref<2x128xi32, #tpu.memory_space<vmem>>) attributes {dimension_semantics = [#tpu.dimension_semantics<parallel>], iteration_bounds = array<i64: 1>, scalar_prefetch = 0 : i64, scratch_operands = 0 : i64, tpu.core_type = #tpu.core_type<tc>, window_params = [{transform_indices = @transform_0, window_bounds = array<i64: 128, 32>}, {pipeline_mode = #tpu.pipeline_mode<synchronous>, transform_indices = @transform_1, window_bounds = array<i64: 32, 256>}, {pipeline_mode = #tpu.pipeline_mode<synchronous>, transform_indices = @transform_2, window_bounds = array<i64: 1, 256>}, {transform_indices = @transform_3, window_bounds = array<i64: 128, 128>}, {transform_indices = @transform_4, window_bounds = array<i64: 8, 128>}, {transform_indices = @transform_5, window_bounds = array<i64: 2, 128>}]} {
    %c0 = arith.constant 0 : index
    %c0_0 = arith.constant 0 : index
    %0 = vector.load %arg1[%c0, %c0_0] : memref<128x32xbf16, #tpu.memory_space<vmem>>, vector<128x32xbf16>
    %c0_1 = arith.constant 0 : index
    %c0_2 = arith.constant 0 : index
    %1 = vector.load %arg2[%c0_1, %c0_2] : memref<32x256xbf16, #tpu.memory_space<vmem>>, vector<32x256xbf16>
    %cst = arith.constant dense<0.000000e+00> : vector<128x256xf32>
    %2 = tpu.matmul %0, %1, %cst {dimension_numbers = #tpu.dot_dimension_numbers<[1], [0], [0], [1], [0, 0, 1, 1], [], []>} : vector<128x32xbf16>, vector<32x256xbf16>, vector<128x256xf32> -> vector<128x256xf32>
    %c0_3 = arith.constant 0 : index
    %c0_4 = arith.constant 0 : index
    %3 = vector.load %arg3[%c0_3, %c0_4] : memref<1x256xf32, #tpu.memory_space<vmem>>, vector<1x256xf32>
    %4 = vector.broadcast %3 : vector<1x256xf32> to vector<128x256xf32>
    %5 = arith.addf %2, %4 : vector<128x256xf32>
    %6 = vector.extract_strided_slice %5 {offsets = [0, 0], sizes = [128, 128], strides = [1, 1]} : vector<128x256xf32> to vector<128x128xf32>
    %7 = vector.extract_strided_slice %5 {offsets = [0, 128], sizes = [128, 128], strides = [1, 1]} : vector<128x256xf32> to vector<128x128xf32>
    %cst_5 = arith.constant 0.000000e+00 : f32
    %8 = vector.broadcast %cst_5 : f32 to vector<128x128xf32>
    %9 = arith.maximumf %7, %8 : vector<128x128xf32>
    %10 = math.absf %7 : vector<128x128xf32>
    %cst_6 = arith.constant 0.000000e+00 : f32
    %11 = vector.broadcast %cst_6 : f32 to vector<128x128xf32>
    %12 = arith.subf %11, %10 : vector<128x128xf32>
    %13 = math.exp %12 : vector<128x128xf32>
    %14 = math.log1p %13 : vector<128x128xf32>
    %15 = arith.addf %9, %14 : vector<128x128xf32>
    %c0_7 = arith.constant 0 : index
    %c0_8 = arith.constant 0 : index
    %16 = vector.load %arg4[%c0_7, %c0_8] : memref<128x128xf32, #tpu.memory_space<vmem>>, vector<128x128xf32>
    %17 = arith.mulf %16, %15 : vector<128x128xf32>
    %18 = arith.addf %6, %17 : vector<128x128xf32>
    %19 = tpu.iota {dimensions = array<i32: 1>} : vector<128x128xi32>
    %20 = arith.sitofp %19 : vector<128x128xi32> to vector<128x128xf32>
    %c8_i32 = arith.constant 8 : i32
    %21 = vector.broadcast %c8_i32 : i32 to vector<128x128xi32>
    %22 = arith.cmpi slt, %19, %21 : vector<128x128xi32>
    %cst_9 = arith.constant 0xFF800000 : f32
    %23 = vector.broadcast %cst_9 : f32 to vector<128x128xf32>
    %24 = arith.select %22, %18, %23 : vector<128x128xi1>, vector<128x128xf32>
    %false = arith.constant false
    %25 = vector.broadcast %false : i1 to vector<128x128xi1>
    %cst_10 = arith.constant 0.000000e+00 : f32
    %26 = vector.broadcast %cst_10 : f32 to vector<128x128xf32>
    %cst_11 = arith.constant dense<0xFF800000> : vector<128xf32>
    %27 = vector.multi_reduction <maximumf>, %24, %cst_11 [1] : vector<128x128xf32> to vector<128xf32>
    %28 = vector.shape_cast %27 : vector<128xf32> to vector<128x1xf32>
    %29 = vector.broadcast %28 : vector<128x1xf32> to vector<128x128xf32>
    %30 = arith.cmpf oeq, %24, %29 : vector<128x128xf32>
    %cst_12 = arith.constant 1.280000e+02 : f32
    %31 = vector.broadcast %cst_12 : f32 to vector<128x128xf32>
    %32 = arith.select %30, %20, %31 : vector<128x128xi1>, vector<128x128xf32>
    %cst_13 = arith.constant dense<0x7F800000> : vector<128xf32>
    %33 = vector.multi_reduction <minimumf>, %32, %cst_13 [1] : vector<128x128xf32> to vector<128xf32>
    %34 = vector.shape_cast %33 : vector<128xf32> to vector<128x1xf32>
    %35 = vector.broadcast %34 : vector<128x1xf32> to vector<128x128xf32>
    %36 = arith.cmpf oeq, %20, %35 : vector<128x128xf32>
    %37 = arith.ori %25, %36 : vector<128x128xi1>
    %cst_14 = arith.constant 0xFF800000 : f32
    %38 = vector.broadcast %cst_14 : f32 to vector<128x128xf32>
    %39 = arith.select %36, %38, %24 : vector<128x128xi1>, vector<128x128xf32>
    %c0_i32 = arith.constant 0 : i32
    %40 = vector.broadcast %c0_i32 : i32 to vector<128x128xi32>
    %41 = arith.cmpi eq, %19, %40 : vector<128x128xi32>
    %42 = vector.shape_cast %34 : vector<128x1xf32> to vector<128x1xf32>
    %43 = vector.broadcast %42 : vector<128x1xf32> to vector<128x128xf32>
    %44 = arith.select %41, %43, %26 : vector<128x128xi1>, vector<128x128xf32>
    %cst_15 = arith.constant dense<0xFF800000> : vector<128xf32>
    %45 = vector.multi_reduction <maximumf>, %39, %cst_15 [1] : vector<128x128xf32> to vector<128xf32>
    %46 = vector.shape_cast %45 : vector<128xf32> to vector<128x1xf32>
    %47 = vector.broadcast %46 : vector<128x1xf32> to vector<128x128xf32>
    %48 = arith.cmpf oeq, %39, %47 : vector<128x128xf32>
    %cst_16 = arith.constant 1.280000e+02 : f32
    %49 = vector.broadcast %cst_16 : f32 to vector<128x128xf32>
    %50 = arith.select %48, %20, %49 : vector<128x128xi1>, vector<128x128xf32>
    %cst_17 = arith.constant dense<0x7F800000> : vector<128xf32>
    %51 = vector.multi_reduction <minimumf>, %50, %cst_17 [1] : vector<128x128xf32> to vector<128xf32>
    %52 = vector.shape_cast %51 : vector<128xf32> to vector<128x1xf32>
    %53 = vector.broadcast %52 : vector<128x1xf32> to vector<128x128xf32>
    %54 = arith.cmpf oeq, %20, %53 : vector<128x128xf32>
    %55 = arith.ori %37, %54 : vector<128x128xi1>
    %c1_i32 = arith.constant 1 : i32
    %56 = vector.broadcast %c1_i32 : i32 to vector<128x128xi32>
    %57 = arith.cmpi eq, %19, %56 : vector<128x128xi32>
    %58 = vector.shape_cast %52 : vector<128x1xf32> to vector<128x1xf32>
    %59 = vector.broadcast %58 : vector<128x1xf32> to vector<128x128xf32>
    %60 = arith.select %57, %59, %44 : vector<128x128xi1>, vector<128x128xf32>
    %cst_18 = arith.constant 0xFF800000 : f32
    %61 = vector.broadcast %cst_18 : f32 to vector<128x128xf32>
    %62 = arith.select %55, %24, %61 : vector<128x128xi1>, vector<128x128xf32>
    %cst_19 = arith.constant dense<0xFF800000> : vector<128xf32>
    %63 = vector.multi_reduction <maximumf>, %62, %cst_19 [1] : vector<128x128xf32> to vector<128xf32>
    %64 = vector.shape_cast %63 : vector<128xf32> to vector<128x1xf32>
    %65 = vector.broadcast %64 : vector<128x1xf32> to vector<128x128xf32>
    %66 = arith.subf %62, %65 : vector<128x128xf32>
    %67 = math.exp %66 : vector<128x128xf32>
    %cst_20 = arith.constant dense<0.000000e+00> : vector<128xf32>
    %68 = vector.multi_reduction <add>, %67, %cst_20 [1] : vector<128x128xf32> to vector<128xf32>
    %69 = vector.shape_cast %68 : vector<128xf32> to vector<128x1xf32>
    %70 = vector.broadcast %69 : vector<128x1xf32> to vector<128x128xf32>
    %71 = arith.divf %67, %70 : vector<128x128xf32>
    %72 = tpu.transpose %71, [1, 0] : vector<128x128xf32> -> vector<128x128xf32>
    %73 = vector.extract_strided_slice %72 {offsets = [0, 0], sizes = [8, 128], strides = [1, 1]} : vector<128x128xf32> to vector<8x128xf32>
    %c0_21 = arith.constant 0 : index
    %c0_22 = arith.constant 0 : index
    %74 = vector.load %arg5[%c0_21, %c0_22] : memref<8x128xf32, #tpu.memory_space<vmem>>, vector<8x128xf32>
    tpu.vector_store %arg5[%c0_21, %c0_22], %73 {strides = array<i32>} : memref<8x128xf32, #tpu.memory_space<vmem>>, vector<8x128xf32>,
    %75 = tpu.transpose %60, [1, 0] : vector<128x128xf32> -> vector<128x128xf32>
    %76 = vector.extract_strided_slice %75 {offsets = [0, 0], sizes = [2, 128], strides = [1, 1]} : vector<128x128xf32> to vector<2x128xf32>
    %77 = arith.fptosi %76 : vector<2x128xf32> to vector<2x128xi32>
    %c0_23 = arith.constant 0 : index
    %c0_24 = arith.constant 0 : index
    %78 = vector.load %arg6[%c0_23, %c0_24] : memref<2x128xi32, #tpu.memory_space<vmem>>, vector<2x128xi32>
    tpu.vector_store %arg6[%c0_23, %c0_24], %77 {strides = array<i32>} : memref<2x128xi32, #tpu.memory_space<vmem>>, vector<2x128xi32>,
    return
  }
  func.func @transform_0(%arg0: i32) -> (i32, i32) {
    %c0_i32 = arith.constant 0 : i32
    %c0_i32_0 = arith.constant 0 : i32
    return %arg0, %c0_i32 : i32, i32
  }
  func.func @transform_1(%arg0: i32) -> (i32, i32) {
    %c0_i32 = arith.constant 0 : i32
    %c0_i32_0 = arith.constant 0 : i32
    %c0_i32_1 = arith.constant 0 : i32
    return %c0_i32, %c0_i32_0 : i32, i32
  }
  func.func @transform_2(%arg0: i32) -> (i32, i32) {
    %c0_i32 = arith.constant 0 : i32
    %c0_i32_0 = arith.constant 0 : i32
    %c0_i32_1 = arith.constant 0 : i32
    return %c0_i32, %c0_i32_0 : i32, i32
  }
  func.func @transform_3(%arg0: i32) -> (i32, i32) {
    %c0_i32 = arith.constant 0 : i32
    %c0_i32_0 = arith.constant 0 : i32
    return %arg0, %c0_i32 : i32, i32
  }
  func.func @transform_4(%arg0: i32) -> (i32, i32) {
    %c0_i32 = arith.constant 0 : i32
    %c0_i32_0 = arith.constant 0 : i32
    return %c0_i32, %arg0 : i32, i32
  }
  func.func @transform_5(%arg0: i32) -> (i32, i32) {
    %c0_i32 = arith.constant 0 : i32
    %c0_i32_0 = arith.constant 0 : i32
    return %c0_i32, %arg0 : i32, i32
  }
}

</mosaic_0001>

<llo_original>
// kernel: tpu_custom_call.1
$region0: #{tpu_custom_call.1}
  #allocation0 [shape = 'u32[]', space=smem, size = 0x4, offset = 0x4, fixed_abs, tag = 'smem constant byte address 0x4 - core index']
  #allocation1 [shape = 'u32[144,128]{1,0:T(1,128)}', space=vmem, size = 0x12000, scoped, tag = 'internal scratch']
  %s0 = inlined_call_operand.vmem [shape: bf16[128,32], index: 0, kind: input, shape index: {}]
  %s1 = inlined_call_operand.vmem [shape: bf16[32,256], index: 1, kind: input, shape index: {}]
  %s2 = inlined_call_operand.vmem [shape: f32[1,256], index: 2, kind: input, shape index: {}]
  %s3 = inlined_call_operand.hbm [shape: f32[128,128], index: 3, kind: input, shape index: {}]
  %s4 = inlined_call_operand.hbm [shape: f32[8,128], index: 4, kind: output, shape index: {0}]
  %s5 = inlined_call_operand.hbm [shape: s32[2,128], index: 5, kind: output, shape index: {1}]
  %6 = xla_tuple %s4, %s5
  %s7 = sld [smem:[#allocation0]]
  $region38: #{tpu_custom_call.1} parent=0
    _
  %s9 = ssub.s32 1, %s7
  %s10 = scalar_select 0, %s9, %s7
  $region1: #{tpu_custom_call.1} parent=0
    #allocation2 [shape = 'u8[65536]{0}', space=vmem, size = 0x10000, scoped, tag = 'input window, operand 3, single buffered']
    #allocation3 [shape = 's32[1]{0}', space=sflag, size = 0x4, scoped, tag = 'scoped memory for tpu_custom_call.1']
    #allocation4 [shape = 's32[1]{0}', space=sflag, size = 0x4, scoped, tag = 'scoped memory for tpu_custom_call.1']
    #allocation5 [shape = 'u8[4096]{0}', space=vmem, size = 0x1000, scoped, tag = 'output window, operand 0, single buffered']
    #allocation6 [shape = 'u8[1024]{0}', space=vmem, size = 0x400, scoped, tag = 'output window, operand 1, single buffered']
    #allocation7 [shape = 's32[1]{0}', space=sflag, size = 0x4, scoped, tag = 'scoped memory for tpu_custom_call.1']
    %11 = vsyncpa [#allocation3], 0
    %12 = vsyncpa [#allocation4], 0
    %13 = vsyncpa [#allocation7], 0
    // Predicated region
    $region2: #{tpu_custom_call.1} parent=1 // pred_check
      _
    $region3: #{tpu_custom_call.1} parent=1 // pred_check_branch
      %15 = sbr.rel (0) target = $region5
    $region4: #{tpu_custom_call.1} parent=1 // pred_region
      _
    $region5: #{tpu_custom_call.1} parent=1 // pred_fallthru
      _
    // Predicated region
    $region6: #{tpu_custom_call.1} parent=1 // pred_check
      _
    $region7: #{tpu_custom_call.1} parent=1 // pred_check_branch
      %17 = sbr.rel (0) target = $region9
    $region8: #{tpu_custom_call.1} parent=1 // pred_region
      _
    $region9: #{tpu_custom_call.1} parent=1 // pred_fallthru
      _
    // Predicated region
    $region10: #{tpu_custom_call.1} parent=1 // pred_check
      _
    $region11: #{tpu_custom_call.1} parent=1 // pred_check_branch
      %19 = sbr.rel (0) target = $region13
    $region12: #{tpu_custom_call.1} parent=1 // pred_region
      _
    $region13: #{tpu_custom_call.1} parent=1 // pred_fallthru
      _
    // Predicated region
    $region14: #{tpu_custom_call.1} parent=1 // pred_check
      _
    $region15: #{tpu_custom_call.1} parent=1 // pred_check_branch
      %21 = sbr.rel (0) target = $region17
    $region16: #{tpu_custom_call.1} parent=1 // pred_region
      %s23 = ssub.s32 2048, 2048
      %24 = vsyncadd [#allocation3], %s23
      %s25 = sshll.u32 [#allocation2], 4
      %s26 = int_to_ptr.vmem [resolvable:$true] %s25
      %31 = dma.hbm_to_vmem [thread:$0]  %s3, 2048, %s26, [#allocation3], 128, 128, 8
    $region17: #{tpu_custom_call.1} parent=1 // pred_fallthru
      _
    // Predicated region
    $region18: #{tpu_custom_call.1} parent=1 // pred_check
      _
    $region19: #{tpu_custom_call.1} parent=1 // pred_check_branch
      %33 = sbr.rel (0) target = $region21
    $region20: #{tpu_custom_call.1} parent=1 // pred_region
      %34 = dma.done [#allocation3], 2048
    $region21: #{tpu_custom_call.1} parent=1 // pred_fallthru
      _
    %v36 = vld [vmem:[%s0] sm:$0xf]
    %v37 = vld [vmem:[%s0 + $0x4] sm:$0xf]
    %v38 = vld [vmem:[%s0 + $0x8] sm:$0xf]
    %v39 = vld [vmem:[%s0 + $0xc] sm:$0xf]
    %v40 = vld [vmem:[%s0 + $0x10] sm:$0xf]
    %v41 = vld [vmem:[%s0 + $0x14] sm:$0xf]
    %v42 = vld [vmem:[%s0 + $0x18] sm:$0xf]
    %v43 = vld [vmem:[%s0 + $0x1c] sm:$0xf]
    %v44 = vld [vmem:[%s0 + $0x20] sm:$0xf]
    %v45 = vld [vmem:[%s0 + $0x24] sm:$0xf]
    %v46 = vld [vmem:[%s0 + $0x28] sm:$0xf]
    %v47 = vld [vmem:[%s0 + $0x2c] sm:$0xf]
    %v48 = vld [vmem:[%s0 + $0x30] sm:$0xf]
    %v49 = vld [vmem:[%s0 + $0x34] sm:$0xf]
    %v50 = vld [vmem:[%s0 + $0x38] sm:$0xf]
    %v51 = vld [vmem:[%s0 + $0x3c] sm:$0xf]
    %v52 = vld [vmem:[%s1] sm:$0xff]
    %v53 = vld [vmem:[%s1 + $0x8] sm:$0xff]
    %v54 = vld [vmem:[%s1 + $0x10] sm:$0xff]
    %v55 = vld [vmem:[%s1 + $0x18] sm:$0xff]
    %v56 = vld [vmem:[%s2] sm:$0x3]
    %v58 = vlaneseq
    %v59 = vshrl.u32 %v58, 7
    %v60 = vsub.s32 0, %v59
    %v61 = vrot.slane %v56, %v60
    %v62 = vlaneseq
    %v63 = vshrl.u32 %v62, 7
    %v64 = vsub.s32 1, %v63
    %v65 = vrot.slane %v56, %v64
    %v84 = vunpack.c.l.b16 %v36
    %v85 = vunpack.c.l.b16 %v37
    %v86 = vunpack.c.l.b16 %v38
    %v87 = vunpack.c.l.b16 %v39
    %v88 = vunpack.c.l.b16 %v40
    %v89 = vunpack.c.l.b16 %v41
    %v90 = vunpack.c.l.b16 %v42
    %v91 = vunpack.c.l.b16 %v43
    %v92 = vunpack.c.l.b16 %v44
    %v93 = vunpack.c.l.b16 %v45
    %v94 = vunpack.c.l.b16 %v46
    %v95 = vunpack.c.l.b16 %v47
    %v96 = vunpack.c.l.b16 %v48
    %v97 = vunpack.c.l.b16 %v49
    %v98 = vunpack.c.l.b16 %v50
    %v99 = vunpack.c.l.b16 %v51
    %v100 = vpack.c.b16 %v85, %v84
    %v101 = vpack.c.b16 %v87, %v86
    %v102 = vpack.c.b16 %v89, %v88
    %v103 = vpack.c.b16 %v91, %v90
    %v104 = vpack.c.b16 %v93, %v92
    %v105 = vpack.c.b16 %v95, %v94
    %v106 = vpack.c.b16 %v97, %v96
    %v107 = vpack.c.b16 %v99, %v98
    %v112 = vunpack.c.l.b16 %v52
    %v113 = vunpack.c.h.b16 %v52
    %v114 = vunpack.c.l.b16 %v53
    %v115 = vunpack.c.h.b16 %v53
    %v116 = vunpack.c.l.b16 %v54
    %v117 = vunpack.c.h.b16 %v54
    %v118 = vunpack.c.l.b16 %v55
    %v119 = vunpack.c.h.b16 %v55
    %v120 = vpack.c.b16 %v114, %v112
    %v121 = vpack.c.b16 %v115, %v113
    %v122 = vpack.c.b16 %v118, %v116
    %v123 = vpack.c.b16 %v119, %v117
    %vm128 = vcmask 261120
    %v130 = vsel %vm128, %v100, 0
    %v133 = vsel %vm128, %v101, 0
    %v136 = vsel %vm128, %v102, 0
    %v139 = vsel %vm128, %v103, 0
    %v142 = vsel %vm128, %v104, 0
    %v145 = vsel %vm128, %v105, 0
    %v148 = vsel %vm128, %v106, 0
    %v151 = vsel %vm128, %v107, 0
    %153 = vmatprep.subr.bf16.mxu0 %v121
    %154 = vmatpush1.bf16.msra.mxu0 %v120
    %155 = vmatprep.subr.bf16.mxu0 %v123
    %156 = vmatpush1.bf16.msra.mxu0 %v122
    %157 = vmatprep.subr.bf16.mxu0 0
    %158 = vmatpush1.bf16.msra.mxu0 0
    %159 = vmatprep.subr.bf16.mxu0 0
    %160 = vmatpush1.bf16.msra.mxu0 0
    %161 = vmatprep.subr.bf16.mxu0 0
    %162 = vmatpush1.bf16.msra.mxu0 0
    %163 = vmatprep.subr.bf16.mxu0 0
    %164 = vmatpush1.bf16.msra.mxu0 0
    %165 = vmatprep.subr.bf16.mxu0 0
    %166 = vmatpush1.bf16.msra.mxu0 0
    %167 = vmatprep.subr.bf16.mxu0 0
    %168 = vmatpush1.bf16.msra.mxu0 0
    %169 = vmatprep.subr.bf16.mxu0 0
    %170 = vmatpush1.bf16.msra.mxu0 0
    %171 = vmatprep.subr.bf16.mxu0 0
    %172 = vmatpush1.bf16.msra.mxu0 0
    %173 = vmatprep.subr.bf16.mxu0 0
    %174 = vmatpush1.bf16.msra.mxu0 0
    %175 = vmatprep.subr.bf16.mxu0 0
    %176 = vmatpush1.bf16.msra.mxu0 0
    %177 = vmatprep.subr.bf16.mxu0 0
    %178 = vmatpush1.bf16.msra.mxu0 0
    %179 = vmatprep.subr.bf16.mxu0 0
    %180 = vmatpush1.bf16.msra.mxu0 0
    %181 = vmatprep.subr.bf16.mxu0 0
    %182 = vmatpush1.bf16.msra.mxu0 0
    %183 = vmatprep.subr.bf16.mxu0 0
    %184 = vmatpush1.bf16.msra.mxu0 0
    %185 = vmatprep.mubr.bf16.mxu0 0
    %186 = vmatmul.mubr.bf16.gmra.mrb[0].mxu0 %v130
    %v187 = vpop.f32.mrb[0].mxu0
    %v188 = vadd.f32 %v61, %v187
    %v189 = vpop.f32.mrb[0].mxu0
    %v190 = vadd.f32 %v65, %v189
    %v191 = vpop.f32.mrb[0].mxu0
    %v192 = vadd.f32 %v61, %v191
    %v193 = vpop.f32.mrb[0].mxu0
    %v194 = vadd.f32 %v65, %v193
    %195 = vmatprep.mubr.bf16.mxu0 0
    %196 = vmatmul.mubr.bf16.gmra.mrb[0].mxu0 %v133
    %v197 = vpop.f32.mrb[0].mxu0
    %v198 = vadd.f32 %v61, %v197
    %v199 = vpop.f32.mrb[0].mxu0
    %v200 = vadd.f32 %v65, %v199
    %v201 = vpop.f32.mrb[0].mxu0
    %v202 = vadd.f32 %v61, %v201
    %v203 = vpop.f32.mrb[0].mxu0
    %v204 = vadd.f32 %v65, %v203
    %205 = vmatprep.mubr.bf16.mxu0 0
    %206 = vmatmul.mubr.bf16.gmra.mrb[0].mxu0 %v136
    %v207 = vpop.f32.mrb[0].mxu0
    %v208 = vadd.f32 %v61, %v207
    %v209 = vpop.f32.mrb[0].mxu0
    %v210 = vadd.f32 %v65, %v209
    %v211 = vpop.f32.mrb[0].mxu0
    %v212 = vadd.f32 %v61, %v211
    %v213 = vpop.f32.mrb[0].mxu0
    %v214 = vadd.f32 %v65, %v213
    %215 = vmatprep.mubr.bf16.mxu0 0
    %216 = vmatmul.mubr.bf16.gmra.mrb[0].mxu0 %v139
    %v217 = vpop.f32.mrb[0].mxu0
    %v218 = vadd.f32 %v61, %v217
    %v219 = vpop.f32.mrb[0].mxu0
    %v220 = vadd.f32 %v65, %v219
    %v221 = vpop.f32.mrb[0].mxu0
    %v222 = vadd.f32 %v61, %v221
    %v223 = vpop.f32.mrb[0].mxu0
    %v224 = vadd.f32 %v65, %v223
    %225 = vmatprep.mubr.bf16.mxu0 0
    %226 = vmatmul.mubr.bf16.gmra.mrb[0].mxu0 %v142
    %v227 = vpop.f32.mrb[0].mxu0
    %v228 = vadd.f32 %v61, %v227
    %v229 = vpop.f32.mrb[0].mxu0
    %v230 = vadd.f32 %v65, %v229
    %v231 = vpop.f32.mrb[0].mxu0
    %v232 = vadd.f32 %v61, %v231
    %v233 = vpop.f32.mrb[0].mxu0
    %v234 = vadd.f32 %v65, %v233
    %235 = vmatprep.mubr.bf16.mxu0 0
    %236 = vmatmul.mubr.bf16.gmra.mrb[0].mxu0 %v145
    %v237 = vpop.f32.mrb[0].mxu0
    %v238 = vadd.f32 %v61, %v237
    %v239 = vpop.f32.mrb[0].mxu0
    %v240 = vadd.f32 %v65, %v239
    %v241 = vpop.f32.mrb[0].mxu0
    %v242 = vadd.f32 %v61, %v241
    %v243 = vpop.f32.mrb[0].mxu0
    %v244 = vadd.f32 %v65, %v243
    %245 = vmatprep.mubr.bf16.mxu0 0
    %246 = vmatmul.mubr.bf16.gmra.mrb[0].mxu0 %v148
    %v247 = vpop.f32.mrb[0].mxu0
    %v248 = vadd.f32 %v61, %v247
    %v249 = vpop.f32.mrb[0].mxu0
    %v250 = vadd.f32 %v65, %v249
    %v251 = vpop.f32.mrb[0].mxu0
    %v252 = vadd.f32 %v61, %v251
    %v253 = vpop.f32.mrb[0].mxu0
    %v254 = vadd.f32 %v65, %v253
    %255 = vmatprep.mubr.bf16.mxu0 0
    %256 = vmatmul.mubr.bf16.gmra.mrb[0].mxu0 %v151
    %v257 = vpop.f32.mrb[0].mxu0
    %v258 = vadd.f32 %v61, %v257
    %v259 = vpop.f32.mrb[0].mxu0
    %v260 = vadd.f32 %v65, %v259
    %v261 = vpop.f32.mrb[0].mxu0
    %v262 = vadd.f32 %v61, %v261
    %v263 = vpop.f32.mrb[0].mxu0
    %v264 = vadd.f32 %v65, %v263
    %265 = vdwg.mxu0
    %v266 = vmax.f32 %v190, 0.0
    %v267 = vmax.f32 %v194, 0.0
    %v268 = vmax.f32 %v200, 0.0
    %v269 = vmax.f32 %v204, 0.0
    %v270 = vmax.f32 %v210, 0.0
    %v271 = vmax.f32 %v214, 0.0
    %v272 = vmax.f32 %v220, 0.0
    %v273 = vmax.f32 %v224, 0.0
    %v274 = vmax.f32 %v230, 0.0
    %v275 = vmax.f32 %v234, 0.0
    %v276 = vmax.f32 %v240, 0.0
    %v277 = vmax.f32 %v244, 0.0
    %v278 = vmax.f32 %v250, 0.0
    %v279 = vmax.f32 %v254, 0.0
    %v280 = vmax.f32 %v260, 0.0
    %v281 = vmax.f32 %v264, 0.0
    %v282 = vand.u32 2147483647, %v190
    %v283 = vand.u32 2147483647, %v194
    %v284 = vand.u32 2147483647, %v200
    %v285 = vand.u32 2147483647, %v204
    %v286 = vand.u32 2147483647, %v210
    %v287 = vand.u32 2147483647, %v214
    %v288 = vand.u32 2147483647, %v220
    %v289 = vand.u32 2147483647, %v224
    %v290 = vand.u32 2147483647, %v230
    %v291 = vand.u32 2147483647, %v234
    %v292 = vand.u32 2147483647, %v240
    %v293 = vand.u32 2147483647, %v244
    %v294 = vand.u32 2147483647, %v250
    %v295 = vand.u32 2147483647, %v254
    %v296 = vand.u32 2147483647, %v260
    %v297 = vand.u32 2147483647, %v264
    %v298 = vsub.f32 0.0, %v282
    %v299 = vsub.f32 0.0, %v283
    %v300 = vsub.f32 0.0, %v284
    %v301 = vsub.f32 0.0, %v285
    %v302 = vsub.f32 0.0, %v286
    %v303 = vsub.f32 0.0, %v287
    %v304 = vsub.f32 0.0, %v288
    %v305 = vsub.f32 0.0, %v289
    %v306 = vsub.f32 0.0, %v290
    %v307 = vsub.f32 0.0, %v291
    %v308 = vsub.f32 0.0, %v292
    %v309 = vsub.f32 0.0, %v293
    %v310 = vsub.f32 0.0, %v294
    %v311 = vsub.f32 0.0, %v295
    %v312 = vsub.f32 0.0, %v296
    %v313 = vsub.f32 0.0, %v297
    %v314 = vmul.f32 %v298, 1.442695
    %v315 = vpow.pop %v314
    %v316 = vmul.f32 %v299, 1.442695
    %v317 = vpow.pop %v316
    %v318 = vmul.f32 %v300, 1.442695
    %v319 = vpow.pop %v318
    %v320 = vmul.f32 %v301, 1.442695
    %v321 = vpow.pop %v320
    %v322 = vmul.f32 %v302, 1.442695
    %v323 = vpow.pop %v322
    %v324 = vmul.f32 %v303, 1.442695
    %v325 = vpow.pop %v324
    %v326 = vmul.f32 %v304, 1.442695
    %v327 = vpow.pop %v326
    %v328 = vmul.f32 %v305, 1.442695
    %v329 = vpow.pop %v328
    %v330 = vmul.f32 %v306, 1.442695
    %v331 = vpow.pop %v330
    %v332 = vmul.f32 %v307, 1.442695
    %v333 = vpow.pop %v332
    %v334 = vmul.f32 %v308, 1.442695
    %v335 = vpow.pop %v334
    %v336 = vmul.f32 %v309, 1.442695
    %v337 = vpow.pop %v336
    %v338 = vmul.f32 %v310, 1.442695
    %v339 = vpow.pop %v338
    %v340 = vmul.f32 %v311, 1.442695
    %v341 = vpow.pop %v340
    %v342 = vmul.f32 %v312, 1.442695
    %v343 = vpow.pop %v342
    %v344 = vmul.f32 %v313, 1.442695
    %v345 = vpow.pop %v344
    %v346 = vadd.f32 %v315, 1.0
    %v347 = vlog2.pop %v346
    %v348 = vmul.f32 %v347, 0.6931472
    %v349 = vmul.f32 -0.5, %v315
    %v350 = vadd.f32 %v349, 1.0
    %v351 = vmul.f32 %v350, %v315
    %v352 = vand.u32 2147483647, %v315
    %vm353 = vcmp.lt.f32.partialorder %v352, 0.0004427343
    %v354 = vsel %vm353, %v351, %v348
    %v355 = vadd.f32 %v317, 1.0
    %v356 = vlog2.pop %v355
    %v357 = vmul.f32 %v356, 0.6931472
    %v358 = vmul.f32 -0.5, %v317
    %v359 = vadd.f32 %v358, 1.0
    %v360 = vmul.f32 %v359, %v317
    %v361 = vand.u32 2147483647, %v317
    %vm362 = vcmp.lt.f32.partialorder %v361, 0.0004427343
    %v363 = vsel %vm362, %v360, %v357
    %v364 = vadd.f32 %v319, 1.0
    %v365 = vlog2.pop %v364
    %v366 = vmul.f32 %v365, 0.6931472
    %v367 = vmul.f32 -0.5, %v319
    %v368 = vadd.f32 %v367, 1.0
    %v369 = vmul.f32 %v368, %v319
    %v370 = vand.u32 2147483647, %v319
    %vm371 = vcmp.lt.f32.partialorder %v370, 0.0004427343
    %v372 = vsel %vm371, %v369, %v366
    %v373 = vadd.f32 %v321, 1.0
    %v374 = vlog2.pop %v373
    %v375 = vmul.f32 %v374, 0.6931472
    %v376 = vmul.f32 -0.5, %v321
    %v377 = vadd.f32 %v376, 1.0
    %v378 = vmul.f32 %v377, %v321
    %v379 = vand.u32 2147483647, %v321
    %vm380 = vcmp.lt.f32.partialorder %v379, 0.0004427343
    %v381 = vsel %vm380, %v378, %v375
    %v382 = vadd.f32 %v323, 1.0
    %v383 = vlog2.pop %v382
    %v384 = vmul.f32 %v383, 0.6931472
    %v385 = vmul.f32 -0.5, %v323
    %v386 = vadd.f32 %v385, 1.0
    %v387 = vmul.f32 %v386, %v323
    %v388 = vand.u32 2147483647, %v323
    %vm389 = vcmp.lt.f32.partialorder %v388, 0.0004427343
    %v390 = vsel %vm389, %v387, %v384
    %v391 = vadd.f32 %v325, 1.0
    %v392 = vlog2.pop %v391
    %v393 = vmul.f32 %v392, 0.6931472
    %v394 = vmul.f32 -0.5, %v325
    %v395 = vadd.f32 %v394, 1.0
    %v396 = vmul.f32 %v395, %v325
    %v397 = vand.u32 2147483647, %v325
    %vm398 = vcmp.lt.f32.partialorder %v397, 0.0004427343
    %v399 = vsel %vm398, %v396, %v393
    %v400 = vadd.f32 %v327, 1.0
    %v401 = vlog2.pop %v400
    %v402 = vmul.f32 %v401, 0.6931472
    %v403 = vmul.f32 -0.5, %v327
    %v404 = vadd.f32 %v403, 1.0
    %v405 = vmul.f32 %v404, %v327
    %v406 = vand.u32 2147483647, %v327
    %vm407 = vcmp.lt.f32.partialorder %v406, 0.0004427343
    %v408 = vsel %vm407, %v405, %v402
    %v409 = vadd.f32 %v329, 1.0
    %v410 = vlog2.pop %v409
    %v411 = vmul.f32 %v410, 0.6931472
    %v412 = vmul.f32 -0.5, %v329
    %v413 = vadd.f32 %v412, 1.0
    %v414 = vmul.f32 %v413, %v329
    %v415 = vand.u32 2147483647, %v329
    %vm416 = vcmp.lt.f32.partialorder %v415, 0.0004427343
    %v417 = vsel %vm416, %v414, %v411
    %v418 = vadd.f32 %v331, 1.0
    %v419 = vlog2.pop %v418
    %v420 = vmul.f32 %v419, 0.6931472
    %v421 = vmul.f32 -0.5, %v331
    %v422 = vadd.f32 %v421, 1.0
    %v423 = vmul.f32 %v422, %v331
    %v424 = vand.u32 2147483647, %v331
    %vm425 = vcmp.lt.f32.partialorder %v424, 0.0004427343
    %v426 = vsel %vm425, %v423, %v420
    %v427 = vadd.f32 %v333, 1.0
    %v428 = vlog2.pop %v427
    %v429 = vmul.f32 %v428, 0.6931472
    %v430 = vmul.f32 -0.5, %v333
    %v431 = vadd.f32 %v430, 1.0
    %v432 = vmul.f32 %v431, %v333
    %v433 = vand.u32 2147483647, %v333
    %vm434 = vcmp.lt.f32.partialorder %v433, 0.0004427343
    %v435 = vsel %vm434, %v432, %v429
    %v436 = vadd.f32 %v335, 1.0
    %v437 = vlog2.pop %v436
    %v438 = vmul.f32 %v437, 0.6931472
    %v439 = vmul.f32 -0.5, %v335
    %v440 = vadd.f32 %v439, 1.0
    %v441 = vmul.f32 %v440, %v335
    %v442 = vand.u32 2147483647, %v335
    %vm443 = vcmp.lt.f32.partialorder %v442, 0.0004427343
    %v444 = vsel %vm443, %v441, %v438
    %v445 = vadd.f32 %v337, 1.0
    %v446 = vlog2.pop %v445
    %v447 = vmul.f32 %v446, 0.6931472
    %v448 = vmul.f32 -0.5, %v337
    %v449 = vadd.f32 %v448, 1.0
    %v450 = vmul.f32 %v449, %v337
    %v451 = vand.u32 2147483647, %v337
    %vm452 = vcmp.lt.f32.partialorder %v451, 0.0004427343
    %v453 = vsel %vm452, %v450, %v447
    %v454 = vadd.f32 %v339, 1.0
    %v455 = vlog2.pop %v454
    %v456 = vmul.f32 %v455, 0.6931472
    %v457 = vmul.f32 -0.5, %v339
    %v458 = vadd.f32 %v457, 1.0
    %v459 = vmul.f32 %v458, %v339
    %v460 = vand.u32 2147483647, %v339
    %vm461 = vcmp.lt.f32.partialorder %v460, 0.0004427343
    %v462 = vsel %vm461, %v459, %v456
    %v463 = vadd.f32 %v341, 1.0
    %v464 = vlog2.pop %v463
    %v465 = vmul.f32 %v464, 0.6931472
    %v466 = vmul.f32 -0.5, %v341
    %v467 = vadd.f32 %v466, 1.0
    %v468 = vmul.f32 %v467, %v341
    %v469 = vand.u32 2147483647, %v341
    %vm470 = vcmp.lt.f32.partialorder %v469, 0.0004427343
    %v471 = vsel %vm470, %v468, %v465
    %v472 = vadd.f32 %v343, 1.0
    %v473 = vlog2.pop %v472
    %v474 = vmul.f32 %v473, 0.6931472
    %v475 = vmul.f32 -0.5, %v343
    %v476 = vadd.f32 %v475, 1.0
    %v477 = vmul.f32 %v476, %v343
    %v478 = vand.u32 2147483647, %v343
    %vm479 = vcmp.lt.f32.partialorder %v478, 0.0004427343
    %v480 = vsel %vm479, %v477, %v474
    %v481 = vadd.f32 %v345, 1.0
    %v482 = vlog2.pop %v481
    %v483 = vmul.f32 %v482, 0.6931472
    %v484 = vmul.f32 -0.5, %v345
    %v485 = vadd.f32 %v484, 1.0
    %v486 = vmul.f32 %v485, %v345
    %v487 = vand.u32 2147483647, %v345
    %vm488 = vcmp.lt.f32.partialorder %v487, 0.0004427343
    %v489 = vsel %vm488, %v486, %v483
    %v490 = vadd.f32 %v266, %v354
    %v491 = vadd.f32 %v267, %v363
    %v492 = vadd.f32 %v268, %v372
    %v493 = vadd.f32 %v269, %v381
    %v494 = vadd.f32 %v270, %v390
    %v495 = vadd.f32 %v271, %v399
    %v496 = vadd.f32 %v272, %v408
    %v497 = vadd.f32 %v273, %v417
    %v498 = vadd.f32 %v274, %v426
    %v499 = vadd.f32 %v275, %v435
    %v500 = vadd.f32 %v276, %v444
    %v501 = vadd.f32 %v277, %v453
    %v502 = vadd.f32 %v278, %v462
    %v503 = vadd.f32 %v279, %v471
    %v504 = vadd.f32 %v280, %v480
    %v505 = vadd.f32 %v281, %v489
    %v506 = vld [vmem:[#allocation2] sm:$0xff]
    %v507 = vld [vmem:[#allocation2 + $0x8] sm:$0xff]
    %v508 = vld [vmem:[#allocation2 + $0x10] sm:$0xff]
    %v509 = vld [vmem:[#allocation2 + $0x18] sm:$0xff]
    %v510 = vld [vmem:[#allocation2 + $0x20] sm:$0xff]
    %v511 = vld [vmem:[#allocation2 + $0x28] sm:$0xff]
    %v512 = vld [vmem:[#allocation2 + $0x30] sm:$0xff]
    %v513 = vld [vmem:[#allocation2 + $0x38] sm:$0xff]
    %v514 = vld [vmem:[#allocation2 + $0x40] sm:$0xff]
    %v515 = vld [vmem:[#allocation2 + $0x48] sm:$0xff]
    %v516 = vld [vmem:[#allocation2 + $0x50] sm:$0xff]
    %v517 = vld [vmem:[#allocation2 + $0x58] sm:$0xff]
    %v518 = vld [vmem:[#allocation2 + $0x60] sm:$0xff]
    %v519 = vld [vmem:[#allocation2 + $0x68] sm:$0xff]
    %v520 = vld [vmem:[#allocation2 + $0x70] sm:$0xff]
    %v521 = vld [vmem:[#allocation2 + $0x78] sm:$0xff]
    %v522 = vmul.f32 %v506, %v490
    %v523 = vmul.f32 %v507, %v491
    %v524 = vmul.f32 %v508, %v492
    %v525 = vmul.f32 %v509, %v493
    %v526 = vmul.f32 %v510, %v494
    %v527 = vmul.f32 %v511, %v495
    %v528 = vmul.f32 %v512, %v496
    %v529 = vmul.f32 %v513, %v497
    %v530 = vmul.f32 %v514, %v498
    %v531 = vmul.f32 %v515, %v499
    %v532 = vmul.f32 %v516, %v500
    %v533 = vmul.f32 %v517, %v501
    %v534 = vmul.f32 %v518, %v502
    %v535 = vmul.f32 %v519, %v503
    %v536 = vmul.f32 %v520, %v504
    %v537 = vmul.f32 %v521, %v505
    %v538 = vadd.f32 %v188, %v522
    %v539 = vadd.f32 %v192, %v523
    %v540 = vadd.f32 %v198, %v524
    %v541 = vadd.f32 %v202, %v525
    %v542 = vadd.f32 %v208, %v526
    %v543 = vadd.f32 %v212, %v527
    %v544 = vadd.f32 %v218, %v528
    %v545 = vadd.f32 %v222, %v529
    %v546 = vadd.f32 %v228, %v530
    %v547 = vadd.f32 %v232, %v531
    %v548 = vadd.f32 %v238, %v532
    %v549 = vadd.f32 %v242, %v533
    %v550 = vadd.f32 %v248, %v534
    %v551 = vadd.f32 %v252, %v535
    %v552 = vadd.f32 %v258, %v536
    %v553 = vadd.f32 %v262, %v537
    %v554 = vlaneseq
    %v555 = vand.u32 %v554, 127
    %v556 = vcvt.s32.f32 %v555
    %vm557 = vcmp.lt.s32.totalorder %v555, 8
    %v558 = vsel %vm557, %v538, -inf
    %v559 = vsel %vm557, %v539, -inf
    %v560 = vsel %vm557, %v540, -inf
    %v561 = vsel %vm557, %v541, -inf
    %v562 = vsel %vm557, %v542, -inf
    %v563 = vsel %vm557, %v543, -inf
    %v564 = vsel %vm557, %v544, -inf
    %v565 = vsel %vm557, %v545, -inf
    %v566 = vsel %vm557, %v546, -inf
    %v567 = vsel %vm557, %v547, -inf
    %v568 = vsel %vm557, %v548, -inf
    %v569 = vsel %vm557, %v549, -inf
    %v570 = vsel %vm557, %v550, -inf
    %v571 = vsel %vm557, %v551, -inf
    %v572 = vsel %vm557, %v552, -inf
    %v573 = vsel %vm557, %v553, -inf
    %574 = vmax.xlane.f32.xlu0 %v558
    %v575 = vpop.xlane.xlu0 %574
    %576 = vmax.xlane.f32.xlu0 %v559
    %v577 = vpop.xlane.xlu0 %576
    %578 = vmax.xlane.f32.xlu0 %v560
    %v579 = vpop.xlane.xlu0 %578
    %580 = vmax.xlane.f32.xlu0 %v561
    %v581 = vpop.xlane.xlu0 %580
    %582 = vmax.xlane.f32.xlu0 %v562
    %v583 = vpop.xlane.xlu0 %582
    %584 = vmax.xlane.f32.xlu0 %v563
    %v585 = vpop.xlane.xlu0 %584
    %586 = vmax.xlane.f32.xlu0 %v564
    %v587 = vpop.xlane.xlu0 %586
    %588 = vmax.xlane.f32.xlu0 %v565
    %v589 = vpop.xlane.xlu0 %588
    %590 = vmax.xlane.f32.xlu0 %v566
    %v591 = vpop.xlane.xlu0 %590
    %592 = vmax.xlane.f32.xlu0 %v567
    %v593 = vpop.xlane.xlu0 %592
    %594 = vmax.xlane.f32.xlu0 %v568
    %v595 = vpop.xlane.xlu0 %594
    %596 = vmax.xlane.f32.xlu0 %v569
    %v597 = vpop.xlane.xlu0 %596
    %598 = vmax.xlane.f32.xlu0 %v570
    %v599 = vpop.xlane.xlu0 %598
    %600 = vmax.xlane.f32.xlu0 %v571
    %v601 = vpop.xlane.xlu0 %600
    %602 = vmax.xlane.f32.xlu0 %v572
    %v603 = vpop.xlane.xlu0 %602
    %604 = vmax.xlane.f32.xlu0 %v573
    %v605 = vpop.xlane.xlu0 %604
    %vm606 = vcmp.eq.f32.partialorder %v558, %v575
    %vm607 = vcmp.eq.f32.partialorder %v559, %v577
    %vm608 = vcmp.eq.f32.partialorder %v560, %v579
    %vm609 = vcmp.eq.f32.partialorder %v561, %v581
    %vm610 = vcmp.eq.f32.partialorder %v562, %v583
    %vm611 = vcmp.eq.f32.partialorder %v563, %v585
    %vm612 = vcmp.eq.f32.partialorder %v564, %v587
    %vm613 = vcmp.eq.f32.partialorder %v565, %v589
    %vm614 = vcmp.eq.f32.partialorder %v566, %v591
    %vm615 = vcmp.eq.f32.partialorder %v567, %v593
    %vm616 = vcmp.eq.f32.partialorder %v568, %v595
    %vm617 = vcmp.eq.f32.partialorder %v569, %v597
    %vm618 = vcmp.eq.f32.partialorder %v570, %v599
    %vm619 = vcmp.eq.f32.partialorder %v571, %v601
    %vm620 = vcmp.eq.f32.partialorder %v572, %v603
    %vm621 = vcmp.eq.f32.partialorder %v573, %v605
    %v622 = vsel %vm606, %v556, 128.0
    %v623 = vsel %vm607, %v556, 128.0
    %v624 = vsel %vm608, %v556, 128.0
    %v625 = vsel %vm609, %v556, 128.0
    %v626 = vsel %vm610, %v556, 128.0
    %v627 = vsel %vm611, %v556, 128.0
    %v628 = vsel %vm612, %v556, 128.0
    %v629 = vsel %vm613, %v556, 128.0
    %v630 = vsel %vm614, %v556, 128.0
    %v631 = vsel %vm615, %v556, 128.0
    %v632 = vsel %vm616, %v556, 128.0
    %v633 = vsel %vm617, %v556, 128.0
    %v634 = vsel %vm618, %v556, 128.0
    %v635 = vsel %vm619, %v556, 128.0
    %v636 = vsel %vm620, %v556, 128.0
    %v637 = vsel %vm621, %v556, 128.0
    %638 = vmin.xlane.f32.xlu0 %v622
    %v639 = vpop.xlane.xlu0 %638
    %640 = vmin.xlane.f32.xlu0 %v623
    %v641 = vpop.xlane.xlu0 %640
    %642 = vmin.xlane.f32.xlu0 %v624
    %v643 = vpop.xlane.xlu0 %642
    %644 = vmin.xlane.f32.xlu0 %v625
    %v645 = vpop.xlane.xlu0 %644
    %646 = vmin.xlane.f32.xlu0 %v626
    %v647 = vpop.xlane.xlu0 %646
    %648 = vmin.xlane.f32.xlu0 %v627
    %v649 = vpop.xlane.xlu0 %648
    %650 = vmin.xlane.f32.xlu0 %v628
    %v651 = vpop.xlane.xlu0 %650
    %652 = vmin.xlane.f32.xlu0 %v629
    %v653 = vpop.xlane.xlu0 %652
    %654 = vmin.xlane.f32.xlu0 %v630
    %v655 = vpop.xlane.xlu0 %654
    %656 = vmin.xlane.f32.xlu0 %v631
    %v657 = vpop.xlane.xlu0 %656
    %658 = vmin.xlane.f32.xlu0 %v632
    %v659 = vpop.xlane.xlu0 %658
    %660 = vmin.xlane.f32.xlu0 %v633
    %v661 = vpop.xlane.xlu0 %660
    %662 = vmin.xlane.f32.xlu0 %v634
    %v663 = vpop.xlane.xlu0 %662
    %664 = vmin.xlane.f32.xlu0 %v635
    %v665 = vpop.xlane.xlu0 %664
    %666 = vmin.xlane.f32.xlu0 %v636
    %v667 = vpop.xlane.xlu0 %666
    %668 = vmin.xlane.f32.xlu0 %v637
    %v669 = vpop.xlane.xlu0 %668
    %vm670 = vcmp.eq.f32.partialorder %v556, %v639
    %vm671 = vcmp.eq.f32.partialorder %v556, %v641
    %vm672 = vcmp.eq.f32.partialorder %v556, %v643
    %vm673 = vcmp.eq.f32.partialorder %v556, %v645
    %vm674 = vcmp.eq.f32.partialorder %v556, %v647
    %vm675 = vcmp.eq.f32.partialorder %v556, %v649
    %vm676 = vcmp.eq.f32.partialorder %v556, %v651
    %vm677 = vcmp.eq.f32.partialorder %v556, %v653
    %vm678 = vcmp.eq.f32.partialorder %v556, %v655
    %vm679 = vcmp.eq.f32.partialorder %v556, %v657
    %vm680 = vcmp.eq.f32.partialorder %v556, %v659
    %vm681 = vcmp.eq.f32.partialorder %v556, %v661
    %vm682 = vcmp.eq.f32.partialorder %v556, %v663
    %vm683 = vcmp.eq.f32.partialorder %v556, %v665
    %vm684 = vcmp.eq.f32.partialorder %v556, %v667
    %vm685 = vcmp.eq.f32.partialorder %v556, %v669
    %v686 = vsel %vm670, -inf, %v558
    %v687 = vsel %vm671, -inf, %v559
    %v688 = vsel %vm672, -inf, %v560
    %v689 = vsel %vm673, -inf, %v561
    %v690 = vsel %vm674, -inf, %v562
    %v691 = vsel %vm675, -inf, %v563
    %v692 = vsel %vm676, -inf, %v564
    %v693 = vsel %vm677, -inf, %v565
    %v694 = vsel %vm678, -inf, %v566
    %v695 = vsel %vm679, -inf, %v567
    %v696 = vsel %vm680, -inf, %v568
    %v697 = vsel %vm681, -inf, %v569
    %v698 = vsel %vm682, -inf, %v570
    %v699 = vsel %vm683, -inf, %v571
    %v700 = vsel %vm684, -inf, %v572
    %v701 = vsel %vm685, -inf, %v573
    %vm702 = vcmp.eq.s32.totalorder %v555, 0
    %v703 = vsel %vm702, %v639, 0.0
    %v704 = vsel %vm702, %v641, 0.0
    %v705 = vsel %vm702, %v643, 0.0
    %v706 = vsel %vm702, %v645, 0.0
    %v707 = vsel %vm702, %v647, 0.0
    %v708 = vsel %vm702, %v649, 0.0
    %v709 = vsel %vm702, %v651, 0.0
    %v710 = vsel %vm702, %v653, 0.0
    %v711 = vsel %vm702, %v655, 0.0
    %v712 = vsel %vm702, %v657, 0.0
    %v713 = vsel %vm702, %v659, 0.0
    %v714 = vsel %vm702, %v661, 0.0
    %v715 = vsel %vm702, %v663, 0.0
    %v716 = vsel %vm702, %v665, 0.0
    %v717 = vsel %vm702, %v667, 0.0
    %v718 = vsel %vm702, %v669, 0.0
    %719 = vmax.xlane.f32.xlu0 %v686
    %v720 = vpop.xlane.xlu0 %719
    %721 = vmax.xlane.f32.xlu0 %v687
    %v722 = vpop.xlane.xlu0 %721
    %723 = vmax.xlane.f32.xlu0 %v688
    %v724 = vpop.xlane.xlu0 %723
    %725 = vmax.xlane.f32.xlu0 %v689
    %v726 = vpop.xlane.xlu0 %725
    %727 = vmax.xlane.f32.xlu0 %v690
    %v728 = vpop.xlane.xlu0 %727
    %729 = vmax.xlane.f32.xlu0 %v691
    %v730 = vpop.xlane.xlu0 %729
    %731 = vmax.xlane.f32.xlu0 %v692
    %v732 = vpop.xlane.xlu0 %731
    %733 = vmax.xlane.f32.xlu0 %v693
    %v734 = vpop.xlane.xlu0 %733
    %735 = vmax.xlane.f32.xlu0 %v694
    %v736 = vpop.xlane.xlu0 %735
    %737 = vmax.xlane.f32.xlu0 %v695
    %v738 = vpop.xlane.xlu0 %737
    %739 = vmax.xlane.f32.xlu0 %v696
    %v740 = vpop.xlane.xlu0 %739
    %741 = vmax.xlane.f32.xlu0 %v697
    %v742 = vpop.xlane.xlu0 %741
    %743 = vmax.xlane.f32.xlu0 %v698
    %v744 = vpop.xlane.xlu0 %743
    %745 = vmax.xlane.f32.xlu0 %v699
    %v746 = vpop.xlane.xlu0 %745
    %747 = vmax.xlane.f32.xlu0 %v700
    %v748 = vpop.xlane.xlu0 %747
    %749 = vmax.xlane.f32.xlu0 %v701
    %v750 = vpop.xlane.xlu0 %749
    %vm751 = vcmp.eq.f32.partialorder %v686, %v720
    %vm752 = vcmp.eq.f32.partialorder %v687, %v722
    %vm753 = vcmp.eq.f32.partialorder %v688, %v724
    %vm754 = vcmp.eq.f32.partialorder %v689, %v726
    %vm755 = vcmp.eq.f32.partialorder %v690, %v728
    %vm756 = vcmp.eq.f32.partialorder %v691, %v730
    %vm757 = vcmp.eq.f32.partialorder %v692, %v732
    %vm758 = vcmp.eq.f32.partialorder %v693, %v734
    %vm759 = vcmp.eq.f32.partialorder %v694, %v736
    %vm760 = vcmp.eq.f32.partialorder %v695, %v738
    %vm761 = vcmp.eq.f32.partialorder %v696, %v740
    %vm762 = vcmp.eq.f32.partialorder %v697, %v742
    %vm763 = vcmp.eq.f32.partialorder %v698, %v744
    %vm764 = vcmp.eq.f32.partialorder %v699, %v746
    %vm765 = vcmp.eq.f32.partialorder %v700, %v748
    %vm766 = vcmp.eq.f32.partialorder %v701, %v750
    %v767 = vsel %vm751, %v556, 128.0
    %v768 = vsel %vm752, %v556, 128.0
    %v769 = vsel %vm753, %v556, 128.0
    %v770 = vsel %vm754, %v556, 128.0
    %v771 = vsel %vm755, %v556, 128.0
    %v772 = vsel %vm756, %v556, 128.0
    %v773 = vsel %vm757, %v556, 128.0
    %v774 = vsel %vm758, %v556, 128.0
    %v775 = vsel %vm759, %v556, 128.0
    %v776 = vsel %vm760, %v556, 128.0
    %v777 = vsel %vm761, %v556, 128.0
    %v778 = vsel %vm762, %v556, 128.0
    %v779 = vsel %vm763, %v556, 128.0
    %v780 = vsel %vm764, %v556, 128.0
    %v781 = vsel %vm765, %v556, 128.0
    %v782 = vsel %vm766, %v556, 128.0
    %783 = vmin.xlane.f32.xlu0 %v767
    %v784 = vpop.xlane.xlu0 %783
    %785 = vmin.xlane.f32.xlu0 %v768
    %v786 = vpop.xlane.xlu0 %785
    %787 = vmin.xlane.f32.xlu0 %v769
    %v788 = vpop.xlane.xlu0 %787
    %789 = vmin.xlane.f32.xlu0 %v770
    %v790 = vpop.xlane.xlu0 %789
    %791 = vmin.xlane.f32.xlu0 %v771
    %v792 = vpop.xlane.xlu0 %791
    %793 = vmin.xlane.f32.xlu0 %v772
    %v794 = vpop.xlane.xlu0 %793
    %795 = vmin.xlane.f32.xlu0 %v773
    %v796 = vpop.xlane.xlu0 %795
    %797 = vmin.xlane.f32.xlu0 %v774
    %v798 = vpop.xlane.xlu0 %797
    %799 = vmin.xlane.f32.xlu0 %v775
    %v800 = vpop.xlane.xlu0 %799
    %801 = vmin.xlane.f32.xlu0 %v776
    %v802 = vpop.xlane.xlu0 %801
    %803 = vmin.xlane.f32.xlu0 %v777
    %v804 = vpop.xlane.xlu0 %803
    %805 = vmin.xlane.f32.xlu0 %v778
    %v806 = vpop.xlane.xlu0 %805
    %807 = vmin.xlane.f32.xlu0 %v779
    %v808 = vpop.xlane.xlu0 %807
    %809 = vmin.xlane.f32.xlu0 %v780
    %v810 = vpop.xlane.xlu0 %809
    %811 = vmin.xlane.f32.xlu0 %v781
    %v812 = vpop.xlane.xlu0 %811
    %813 = vmin.xlane.f32.xlu0 %v782
    %v814 = vpop.xlane.xlu0 %813
    %vm815 = vcmp.eq.f32.partialorder %v556, %v784
    %vm816 = vcmp.eq.f32.partialorder %v556, %v786
    %vm817 = vcmp.eq.f32.partialorder %v556, %v788
    %vm818 = vcmp.eq.f32.partialorder %v556, %v790
    %vm819 = vcmp.eq.f32.partialorder %v556, %v792
    %vm820 = vcmp.eq.f32.partialorder %v556, %v794
    %vm821 = vcmp.eq.f32.partialorder %v556, %v796
    %vm822 = vcmp.eq.f32.partialorder %v556, %v798
    %vm823 = vcmp.eq.f32.partialorder %v556, %v800
    %vm824 = vcmp.eq.f32.partialorder %v556, %v802
    %vm825 = vcmp.eq.f32.partialorder %v556, %v804
    %vm826 = vcmp.eq.f32.partialorder %v556, %v806
    %vm827 = vcmp.eq.f32.partialorder %v556, %v808
    %vm828 = vcmp.eq.f32.partialorder %v556, %v810
    %vm829 = vcmp.eq.f32.partialorder %v556, %v812
    %vm830 = vcmp.eq.f32.partialorder %v556, %v814
    %vm831 = vmor %vm670, %vm815
    %vm832 = vmor %vm671, %vm816
    %vm833 = vmor %vm672, %vm817
    %vm834 = vmor %vm673, %vm818
    %vm835 = vmor %vm674, %vm819
    %vm836 = vmor %vm675, %vm820
    %vm837 = vmor %vm676, %vm821
    %vm838 = vmor %vm677, %vm822
    %vm839 = vmor %vm678, %vm823
    %vm840 = vmor %vm679, %vm824
    %vm841 = vmor %vm680, %vm825
    %vm842 = vmor %vm681, %vm826
    %vm843 = vmor %vm682, %vm827
    %vm844 = vmor %vm683, %vm828
    %vm845 = vmor %vm684, %vm829
    %vm846 = vmor %vm685, %vm830
    %vm847 = vcmp.eq.s32.totalorder %v555, 1
    %v848 = vsel %vm847, %v784, %v703
    %v849 = vsel %vm847, %v786, %v704
    %v850 = vsel %vm847, %v788, %v705
    %v851 = vsel %vm847, %v790, %v706
    %v852 = vsel %vm847, %v792, %v707
    %v853 = vsel %vm847, %v794, %v708
    %v854 = vsel %vm847, %v796, %v709
    %v855 = vsel %vm847, %v798, %v710
    %v856 = vsel %vm847, %v800, %v711
    %v857 = vsel %vm847, %v802, %v712
    %v858 = vsel %vm847, %v804, %v713
    %v859 = vsel %vm847, %v806, %v714
    %v860 = vsel %vm847, %v808, %v715
    %v861 = vsel %vm847, %v810, %v716
    %v862 = vsel %vm847, %v812, %v717
    %v863 = vsel %vm847, %v814, %v718
    %v864 = vsel %vm831, %v558, -inf
    %v865 = vsel %vm832, %v559, -inf
    %v866 = vsel %vm833, %v560, -inf
    %v867 = vsel %vm834, %v561, -inf
    %v868 = vsel %vm835, %v562, -inf
    %v869 = vsel %vm836, %v563, -inf
    %v870 = vsel %vm837, %v564, -inf
    %v871 = vsel %vm838, %v565, -inf
    %v872 = vsel %vm839, %v566, -inf
    %v873 = vsel %vm840, %v567, -inf
    %v874 = vsel %vm841, %v568, -inf
    %v875 = vsel %vm842, %v569, -inf
    %v876 = vsel %vm843, %v570, -inf
    %v877 = vsel %vm844, %v571, -inf
    %v878 = vsel %vm845, %v572, -inf
    %v879 = vsel %vm846, %v573, -inf
    %880 = vmax.xlane.f32.xlu0 %v864
    %v881 = vpop.xlane.xlu0 %880
    %882 = vmax.xlane.f32.xlu0 %v865
    %v883 = vpop.xlane.xlu0 %882
    %884 = vmax.xlane.f32.xlu0 %v866
    %v885 = vpop.xlane.xlu0 %884
    %886 = vmax.xlane.f32.xlu0 %v867
    %v887 = vpop.xlane.xlu0 %886
    %888 = vmax.xlane.f32.xlu0 %v868
    %v889 = vpop.xlane.xlu0 %888
    %890 = vmax.xlane.f32.xlu0 %v869
    %v891 = vpop.xlane.xlu0 %890
    %892 = vmax.xlane.f32.xlu0 %v870
    %v893 = vpop.xlane.xlu0 %892
    %894 = vmax.xlane.f32.xlu0 %v871
    %v895 = vpop.xlane.xlu0 %894
    %896 = vmax.xlane.f32.xlu0 %v872
    %v897 = vpop.xlane.xlu0 %896
    %898 = vmax.xlane.f32.xlu0 %v873
    %v899 = vpop.xlane.xlu0 %898
    %900 = vmax.xlane.f32.xlu0 %v874
    %v901 = vpop.xlane.xlu0 %900
    %902 = vmax.xlane.f32.xlu0 %v875
    %v903 = vpop.xlane.xlu0 %902
    %904 = vmax.xlane.f32.xlu0 %v876
    %v905 = vpop.xlane.xlu0 %904
    %906 = vmax.xlane.f32.xlu0 %v877
    %v907 = vpop.xlane.xlu0 %906
    %908 = vmax.xlane.f32.xlu0 %v878
    %v909 = vpop.xlane.xlu0 %908
    %910 = vmax.xlane.f32.xlu0 %v879
    %v911 = vpop.xlane.xlu0 %910
    %v912 = vsub.f32 %v864, %v881
    %v913 = vsub.f32 %v865, %v883
    %v914 = vsub.f32 %v866, %v885
    %v915 = vsub.f32 %v867, %v887
    %v916 = vsub.f32 %v868, %v889
    %v917 = vsub.f32 %v869, %v891
    %v918 = vsub.f32 %v870, %v893
    %v919 = vsub.f32 %v871, %v895
    %v920 = vsub.f32 %v872, %v897
    %v921 = vsub.f32 %v873, %v899
    %v922 = vsub.f32 %v874, %v901
    %v923 = vsub.f32 %v875, %v903
    %v924 = vsub.f32 %v876, %v905
    %v925 = vsub.f32 %v877, %v907
    %v926 = vsub.f32 %v878, %v909
    %v927 = vsub.f32 %v879, %v911
    %v928 = vmul.f32 %v912, 1.442695
    %v929 = vpow.pop %v928
    %v930 = vmul.f32 %v913, 1.442695
    %v931 = vpow.pop %v930
    %v932 = vmul.f32 %v914, 1.442695
    %v933 = vpow.pop %v932
    %v934 = vmul.f32 %v915, 1.442695
    %v935 = vpow.pop %v934
    %v936 = vmul.f32 %v916, 1.442695
    %v937 = vpow.pop %v936
    %v938 = vmul.f32 %v917, 1.442695
    %v939 = vpow.pop %v938
    %v940 = vmul.f32 %v918, 1.442695
    %v941 = vpow.pop %v940
    %v942 = vmul.f32 %v919, 1.442695
    %v943 = vpow.pop %v942
    %v944 = vmul.f32 %v920, 1.442695
    %v945 = vpow.pop %v944
    %v946 = vmul.f32 %v921, 1.442695
    %v947 = vpow.pop %v946
    %v948 = vmul.f32 %v922, 1.442695
    %v949 = vpow.pop %v948
    %v950 = vmul.f32 %v923, 1.442695
    %v951 = vpow.pop %v950
    %v952 = vmul.f32 %v924, 1.442695
    %v953 = vpow.pop %v952
    %v954 = vmul.f32 %v925, 1.442695
    %v955 = vpow.pop %v954
    %v956 = vmul.f32 %v926, 1.442695
    %v957 = vpow.pop %v956
    %v958 = vmul.f32 %v927, 1.442695
    %v959 = vpow.pop %v958
    %960 = vadd.xlane.f32.xlu0 %v929
    %v961 = vpop.xlane.xlu0 %960
    %962 = vadd.xlane.f32.xlu0 %v931
    %v963 = vpop.xlane.xlu0 %962
    %964 = vadd.xlane.f32.xlu0 %v933
    %v965 = vpop.xlane.xlu0 %964
    %966 = vadd.xlane.f32.xlu0 %v935
    %v967 = vpop.xlane.xlu0 %966
    %968 = vadd.xlane.f32.xlu0 %v937
    %v969 = vpop.xlane.xlu0 %968
    %970 = vadd.xlane.f32.xlu0 %v939
    %v971 = vpop.xlane.xlu0 %970
    %972 = vadd.xlane.f32.xlu0 %v941
    %v973 = vpop.xlane.xlu0 %972
    %974 = vadd.xlane.f32.xlu0 %v943
    %v975 = vpop.xlane.xlu0 %974
    %976 = vadd.xlane.f32.xlu0 %v945
    %v977 = vpop.xlane.xlu0 %976
    %978 = vadd.xlane.f32.xlu0 %v947
    %v979 = vpop.xlane.xlu0 %978
    %980 = vadd.xlane.f32.xlu0 %v949
    %v981 = vpop.xlane.xlu0 %980
    %982 = vadd.xlane.f32.xlu0 %v951
    %v983 = vpop.xlane.xlu0 %982
    %984 = vadd.xlane.f32.xlu0 %v953
    %v985 = vpop.xlane.xlu0 %984
    %986 = vadd.xlane.f32.xlu0 %v955
    %v987 = vpop.xlane.xlu0 %986
    %988 = vadd.xlane.f32.xlu0 %v957
    %v989 = vpop.xlane.xlu0 %988
    %990 = vadd.xlane.f32.xlu0 %v959
    %v991 = vpop.xlane.xlu0 %990
    %v992 = vrcp.pop %v961
    %v993 = vmul.f32 %v929, %v992
    %v994 = vrcp.pop %v963
    %v995 = vmul.f32 %v931, %v994
    %v996 = vrcp.pop %v965
    %v997 = vmul.f32 %v933, %v996
    %v998 = vrcp.pop %v967
    %v999 = vmul.f32 %v935, %v998
    %v1000 = vrcp.pop %v969
    %v1001 = vmul.f32 %v937, %v1000
    %v1002 = vrcp.pop %v971
    %v1003 = vmul.f32 %v939, %v1002
    %v1004 = vrcp.pop %v973
    %v1005 = vmul.f32 %v941, %v1004
    %v1006 = vrcp.pop %v975
    %v1007 = vmul.f32 %v943, %v1006
    %v1008 = vrcp.pop %v977
    %v1009 = vmul.f32 %v945, %v1008
    %v1010 = vrcp.pop %v979
    %v1011 = vmul.f32 %v947, %v1010
    %v1012 = vrcp.pop %v981
    %v1013 = vmul.f32 %v949, %v1012
    %v1014 = vrcp.pop %v983
    %v1015 = vmul.f32 %v951, %v1014
    %v1016 = vrcp.pop %v985
    %v1017 = vmul.f32 %v953, %v1016
    %v1018 = vrcp.pop %v987
    %v1019 = vmul.f32 %v955, %v1018
    %v1020 = vrcp.pop %v989
    %v1021 = vmul.f32 %v957, %v1020
    %v1022 = vrcp.pop %v991
    %v1023 = vmul.f32 %v959, %v1022
    %1024 = vxpose.xlu0.b32.start [1/16] %v993, 128
    %1025 = vxpose.xlu0.b32.cont [2/16] %v995, 128
    %1026 = vxpose.xlu0.b32.cont [3/16] %v997, 128
    %1027 = vxpose.xlu0.b32.cont [4/16] %v999, 128
    %1028 = vxpose.xlu0.b32.cont [5/16] %v1001, 128
    %1029 = vxpose.xlu0.b32.cont [6/16] %v1003, 128
    %1030 = vxpose.xlu0.b32.cont [7/16] %v1005, 128
    %1031 = vxpose.xlu0.b32.cont [8/16] %v1007, 128
    %1032 = vxpose.xlu0.b32.cont [9/16] %v1009, 128
    %1033 = vxpose.xlu0.b32.cont [10/16] %v1011, 128
    %1034 = vxpose.xlu0.b32.cont [11/16] %v1013, 128
    %1035 = vxpose.xlu0.b32.cont [12/16] %v1015, 128
    %1036 = vxpose.xlu0.b32.cont [13/16] %v1017, 128
    %1037 = vxpose.xlu0.b32.cont [14/16] %v1019, 128
    %1038 = vxpose.xlu0.b32.cont [15/16] %v1021, 128
    %1039 = vxpose.xlu0.b32.end [16/16] %v1023, 128
    %v1040 = vpop.trf.xlu0
    %v1041 = vpop.trf.xlu0
    %v1042 = vpop.trf.xlu0
    %v1043 = vpop.trf.xlu0
    %v1044 = vpop.trf.xlu0
    %v1045 = vpop.trf.xlu0
    %v1046 = vpop.trf.xlu0
    %v1047 = vpop.trf.xlu0
    %v1048 = vpop.trf.xlu0
    %v1049 = vpop.trf.xlu0
    %v1050 = vpop.trf.xlu0
    %v1051 = vpop.trf.xlu0
    %v1052 = vpop.trf.xlu0
    %v1053 = vpop.trf.xlu0
    %v1054 = vpop.trf.xlu0
    %v1055 = vpop.trf.xlu0
    %1056 = vst [vmem:[#allocation5] sm:$0xff] %v1040
    %1057 = vxpose.xlu0.b32.start [1/16] %v848, 128
    %1058 = vxpose.xlu0.b32.cont [2/16] %v849, 128
    %1059 = vxpose.xlu0.b32.cont [3/16] %v850, 128
    %1060 = vxpose.xlu0.b32.cont [4/16] %v851, 128
    %1061 = vxpose.xlu0.b32.cont [5/16] %v852, 128
    %1062 = vxpose.xlu0.b32.cont [6/16] %v853, 128
    %1063 = vxpose.xlu0.b32.cont [7/16] %v854, 128
    %1064 = vxpose.xlu0.b32.cont [8/16] %v855, 128
    %1065 = vxpose.xlu0.b32.cont [9/16] %v856, 128
    %1066 = vxpose.xlu0.b32.cont [10/16] %v857, 128
    %1067 = vxpose.xlu0.b32.cont [11/16] %v858, 128
    %1068 = vxpose.xlu0.b32.cont [12/16] %v859, 128
    %1069 = vxpose.xlu0.b32.cont [13/16] %v860, 128
    %1070 = vxpose.xlu0.b32.cont [14/16] %v861, 128
    %1071 = vxpose.xlu0.b32.cont [15/16] %v862, 128
    %1072 = vxpose.xlu0.b32.end [16/16] %v863, 128
    %v1073 = vpop.trf.xlu0
    %v1074 = vpop.trf.xlu0
    %v1075 = vpop.trf.xlu0
    %v1076 = vpop.trf.xlu0
    %v1077 = vpop.trf.xlu0
    %v1078 = vpop.trf.xlu0
    %v1079 = vpop.trf.xlu0
    %v1080 = vpop.trf.xlu0
    %v1081 = vpop.trf.xlu0
    %v1082 = vpop.trf.xlu0
    %v1083 = vpop.trf.xlu0
    %v1084 = vpop.trf.xlu0
    %v1085 = vpop.trf.xlu0
    %v1086 = vpop.trf.xlu0
    %v1087 = vpop.trf.xlu0
    %v1088 = vpop.trf.xlu0
    %v1089 = vcvt.f32.s32.to.zero.pseudo %v1073
    %1090 = vst [vmem:[#allocation6] sm:$0x3] %v1089
    // Predicated region
    $region22: #{tpu_custom_call.1} parent=1 // pred_check
      _
    $region23: #{tpu_custom_call.1} parent=1 // pred_check_branch
      %1092 = sbr.rel (0) target = $region25
    $region24: #{tpu_custom_call.1} parent=1 // pred_region
      %s1094 = ssub.s32 128, 128
      %1095 = vsyncadd [#allocation4], %s1094
      %s1097 = sshll.u32 [#allocation5], 4
      %s1098 = int_to_ptr.vmem [resolvable:$true] %s1097
      %1100 = dma.vmem_to_hbm [thread:$0]  %s1098, 128, %s4, [#allocation4]
    $region25: #{tpu_custom_call.1} parent=1 // pred_fallthru
      _
    // Predicated region
    $region26: #{tpu_custom_call.1} parent=1 // pred_check
      _
    $region27: #{tpu_custom_call.1} parent=1 // pred_check_branch
      %1102 = sbr.rel (0) target = $region29
    $region28: #{tpu_custom_call.1} parent=1 // pred_region
      %s1104 = ssub.s32 32, 32
      %1105 = vsyncadd [#allocation7], %s1104
      %s1107 = sshll.u32 [#allocation6], 4
      %s1108 = int_to_ptr.vmem [resolvable:$true] %s1107
      %1110 = dma.vmem_to_hbm [thread:$0]  %s1108, 32, %s5, [#allocation7]
    $region29: #{tpu_custom_call.1} parent=1 // pred_fallthru
      _
    // Predicated region
    $region30: #{tpu_custom_call.1} parent=1 // pred_check
      _
    $region31: #{tpu_custom_call.1} parent=1 // pred_check_branch
      %1112 = sbr.rel (0) target = $region33
    $region32: #{tpu_custom_call.1} parent=1 // pred_region
      %1113 = dma.done [#allocation4], 128
    $region33: #{tpu_custom_call.1} parent=1 // pred_fallthru
      _
    // Predicated region
    $region34: #{tpu_custom_call.1} parent=1 // pred_check
      _
    $region35: #{tpu_custom_call.1} parent=1 // pred_check_branch
      %1115 = sbr.rel (0) target = $region37
    $region36: #{tpu_custom_call.1} parent=1 // pred_region
      %1116 = dma.done [#allocation7], 32
    $region37: #{tpu_custom_call.1} parent=1 // pred_fallthru
      _
    %1117 = vsyncpa [#allocation3], 1
    %1118 = vsyncpa [#allocation4], 1
    %1119 = vsyncpa [#allocation7], 1

</llo_original>
